<compile_context>
chip_gen: v5e
topology: v5e:2x2
jax: 0.10.0
libtpu: 0.0.40
codegen_flags: <defaults>
</compile_context>

<pallas_src>
import jax
import jax.numpy as jnp
from jax import lax
from jax.experimental import pallas as pl
from jax.experimental.pallas import tpu as pltpu


def _multiomics_kernel(xe_ref,      # (TB, E)  expr rows
                       xp_ref,      # (TB, P)  prot rows
                       weT_ref,     # (64, E)  expr_layer weight, transposed
                       beT_ref,     # (64, 1)
                       wpT_ref,     # (64, P)  prot_layer weight, transposed
                       bpT_ref,     # (64, 1)
                       w1eT_ref,    # (64, 64) classifier W1[:64].T
                       w1pT_ref,    # (64, 64) classifier W1[64:].T
                       b1T_ref,     # (64, 1)
                       w2row_ref,   # (1, 64)  head Linear(64,1) weight as a row
                       b2_ref,      # (1,)     head bias, SMEM scalar
                       out_ref):    # (1, TB)  lane-dense sigmoid outputs
    f32 = jnp.float32

    # Branch layers, feature-major: h^T (64, TB) = W^T @ x^T.  The transposed
    # x tile uses the documented jnp.dot(a, b.T) pattern (same as q @ k.T).
    # All ops below are column-local in the TB axis, so garbage rows of a
    # partial trailing block never contaminate valid outputs.
    ehT = jnp.dot(weT_ref[...], xe_ref[...].T,
                  preferred_element_type=f32) + beT_ref[...]
    ehT = jnp.maximum(ehT, 0.0)                 # ReLU; Dropout(0.3) eval == id
    phT = jnp.dot(wpT_ref[...], xp_ref[...].T,
                  preferred_element_type=f32) + bpT_ref[...]
    phT = jnp.maximum(phT, 0.0)                 # ReLU; Dropout(0.3) eval == id

    # Classifier Linear(128, 64): cat(eh, ph) @ W1 == eh @ W1[:64] + ph @ W1[64:]
    h1T = (jnp.dot(w1eT_ref[...], ehT, preferred_element_type=f32)
           + jnp.dot(w1pT_ref[...], phT, preferred_element_type=f32)
           + b1T_ref[...])
    h1T = jnp.maximum(h1T, 0.0)

    # Head Linear(64, 1) + Sigmoid.  M=1 MXU matmul with N=TB lanes -> the
    # result (1, TB) is already lane-dense for the store.
    logits = jnp.dot(w2row_ref[...], h1T, preferred_element_type=f32) + b2_ref[0]
    out_ref[...] = jax.nn.sigmoid(logits)


def multiomics_forward(expr, prot, fused, *, tb=4096):
    """expr: (B, E) f32, prot: (B, P) f32, fused: dict from init_params()."""
    B, E = expr.shape
    _, P = prot.shape
    H = fused["weT"].shape[0]                   # 64

    # Lane-dense (1, TB) output blocks need TB % 128 == 0; when B is smaller
    # than the tile, use a single block whose dims equal the full array dims.
    tb = max(128, (tb // 128) * 128)
    TB = B if B < tb else tb
    grid = (pl.cdiv(B, TB),)                    # partial trailing block allowed

    in_specs = [
        pl.BlockSpec((TB, E), lambda i: (i, 0)),   # expr tile (moves with grid)
        pl.BlockSpec((TB, P), lambda i: (i, 0)),   # prot tile (moves with grid)
        pl.BlockSpec((H, E), lambda i: (0, 0)),    # We^T   (resident)
        pl.BlockSpec((H, 1), lambda i: (0, 0)),    # be^T   (resident)
        pl.BlockSpec((H, P), lambda i: (0, 0)),    # Wp^T   (resident)
        pl.BlockSpec((H, 1), lambda i: (0, 0)),    # bp^T   (resident)
        pl.BlockSpec((H, H), lambda i: (0, 0)),    # W1_e^T (resident)
        pl.BlockSpec((H, H), lambda i: (0, 0)),    # W1_p^T (resident)
        pl.BlockSpec((H, 1), lambda i: (0, 0)),    # b1^T   (resident)
        pl.BlockSpec((1, H), lambda i: (0, 0)),    # w2 row (resident)
        pl.BlockSpec(memory_space=pltpu.MemorySpace.SMEM),   # b2 scalar
    ]
    out_specs = pl.BlockSpec((1, TB), lambda i: (0, i))

    out = pl.pallas_call(
        _multiomics_kernel,
        out_shape=jax.ShapeDtypeStruct((1, B), jnp.float32),
        grid=grid,
        in_specs=in_specs,
        out_specs=out_specs,
        compiler_params=pltpu.CompilerParams(
            # Shard batch tiles across both TensorCores on v7x; keep enough
            # grid steps (>= 2 per core) when raising TB.
            dimension_semantics=("parallel",),
            vmem_limit_bytes=32 * 1024 * 1024,
        ),
    )(expr, prot, fused["weT"], fused["beT"], fused["wpT"], fused["bpT"],
      fused["w1eT"], fused["w1pT"], fused["b1T"], fused["w2row"], fused["b2"])

    # (1, B) lane-dense slab -> (B, 1); tiny wrapper-side layout plumbing.
    return out.reshape(B, 1)


def init_params(key, input_expr, input_prot, hidden=64):
    """PyTorch-style U(-1/sqrt(fan_in), 1/sqrt(fan_in)) init, then fuse."""
    def linear(key, fan_in, fan_out):
        kw, kb = jax.random.split(key)
        bound = 1.0 / jnp.sqrt(jnp.float32(fan_in))
        w = jax.random.uniform(kw, (fan_in, fan_out), jnp.float32, -bound, bound)
        b = jax.random.uniform(kb, (1, fan_out), jnp.float32, -bound, bound)
        return w, b

    k1, k2, k3, k4 = jax.random.split(key, 4)
    we, be = linear(k1, input_expr, hidden)          # expr_layer Linear(E, 64)
    wp, bp = linear(k2, input_prot, hidden)          # prot_layer Linear(P, 64)
    w1, b1 = linear(k3, 2 * hidden, hidden)          # classifier Linear(128, 64)
    w2, b2 = linear(k4, hidden, 1)                   # classifier Linear(64, 1)

    # Raw (torch-equivalent) params for the reference check.
    raw = {"we": we, "be": be, "wp": wp, "bp": bp,
           "w1": w1, "b1": b1, "w2": w2, "b2": b2}

    # Fused / pre-transposed params for the feature-major kernel (one-time).
    fused = {
        "weT": we.T,                          # (64, E)
        "beT": be.reshape(hidden, 1),         # (64, 1)
        "wpT": wp.T,                          # (64, P)
        "bpT": bp.reshape(hidden, 1),         # (64, 1)
        "w1eT": w1[:hidden, :].T,             # (64, 64) acts on expr-hidden
        "w1pT": w1[hidden:, :].T,             # (64, 64) acts on prot-hidden
        "b1T": b1.reshape(hidden, 1),         # (64, 1)
        "w2row": w2.T,                        # (1, 64)
        "b2": b2.reshape(1),                  # (1,) scalar for SMEM
    }
    return raw, fused


if __name__ == "__main__":
    INPUT_EXPR, INPUT_PROT = 16, 8

    key = jax.random.PRNGKey(0)
    k_expr, k_prot, k_params = jax.random.split(key, 3)
    raw, fused = init_params(k_params, INPUT_EXPR, INPUT_PROT)

    def reference(expr, prot):
        # Pure-JAX reference of the ORIGINAL (unfused) module semantics.
        eh = jnp.maximum(expr @ raw["we"] + raw["be"], 0.0)
        ph = jnp.maximum(prot @ raw["wp"] + raw["bp"], 0.0)
        combined = jnp.concatenate([eh, ph], axis=1)
        h1 = jnp.maximum(combined @ raw["w1"] + raw["b1"], 0.0)
        return jax.nn.sigmoid(h1 @ raw["w2"] + raw["b2"])

    # Case 1: small batch (single block; block dims == full array dims).
    B = 2
    expr = jax.random.normal(k_expr, (B, INPUT_EXPR), jnp.float32)
    prot = jax.random.normal(k_prot, (B, INPUT_PROT), jnp.float32)
    out = multiomics_forward(expr, prot, fused)
    jax.block_until_ready(out)
    assert out.shape == (B, 1)
    assert jnp.allclose(out, reference(expr, prot), atol=1e-5)

    # Case 2: multi-tile grid with a partial trailing block (B % TB != 0).
    B2 = 300
    expr2 = jax.random.normal(jax.random.PRNGKey(1), (B2, INPUT_EXPR), jnp.float32)
    prot2 = jax.random.normal(jax.random.PRNGKey(2), (B2, INPUT_PROT), jnp.float32)
    out2 = multiomics_forward(expr2, prot2, fused, tb=128)   # grid = 3, last partial
    jax.block_until_ready(out2)
    assert out2.shape == (B2, 1)
    assert jnp.allclose(out2, reference(expr2, prot2), atol=1e-5)

    print("KERNEL_OK")
</pallas_src>

<mosaic_0001>
module attributes {stable_mosaic.version = 11 : i64} {
  func.func @_multiomics_kernel(%arg0: i32, %arg1: memref<2x16xf32, #tpu.memory_space<vmem>>, %arg2: memref<2x8xf32, #tpu.memory_space<vmem>>, %arg3: memref<64x16xf32, #tpu.memory_space<vmem>>, %arg4: memref<64x1xf32, #tpu.memory_space<vmem>>, %arg5: memref<64x8xf32, #tpu.memory_space<vmem>>, %arg6: memref<64x1xf32, #tpu.memory_space<vmem>>, %arg7: memref<64x64xf32, #tpu.memory_space<vmem>>, %arg8: memref<64x64xf32, #tpu.memory_space<vmem>>, %arg9: memref<64x1xf32, #tpu.memory_space<vmem>>, %arg10: memref<1x64xf32, #tpu.memory_space<vmem>>, %arg11: memref<1xf32, #tpu.memory_space<smem>>, %arg12: memref<1x2xf32, #tpu.memory_space<vmem>>) attributes {dimension_semantics = [#tpu.dimension_semantics<parallel>], iteration_bounds = array<i64: 1>, scalar_prefetch = 0 : i64, scratch_operands = 0 : i64, tpu.core_type = #tpu.core_type<tc>, window_params = [{transform_indices = @transform_0, window_bounds = array<i64: 2, 16>}, {transform_indices = @transform_1, window_bounds = array<i64: 2, 8>}, {pipeline_mode = #tpu.pipeline_mode<synchronous>, transform_indices = @transform_2, window_bounds = array<i64: 64, 16>}, {pipeline_mode = #tpu.pipeline_mode<synchronous>, transform_indices = @transform_3, window_bounds = array<i64: 64, 1>}, {pipeline_mode = #tpu.pipeline_mode<synchronous>, transform_indices = @transform_4, window_bounds = array<i64: 64, 8>}, {pipeline_mode = #tpu.pipeline_mode<synchronous>, transform_indices = @transform_5, window_bounds = array<i64: 64, 1>}, {pipeline_mode = #tpu.pipeline_mode<synchronous>, transform_indices = @transform_6, window_bounds = array<i64: 64, 64>}, {pipeline_mode = #tpu.pipeline_mode<synchronous>, transform_indices = @transform_7, window_bounds = array<i64: 64, 64>}, {pipeline_mode = #tpu.pipeline_mode<synchronous>, transform_indices = @transform_8, window_bounds = array<i64: 64, 1>}, {pipeline_mode = #tpu.pipeline_mode<synchronous>, transform_indices = @transform_9, window_bounds = array<i64: 1, 64>}, {transform_indices = @transform_10, window_bounds = array<i64: 1>}, {transform_indices = @transform_11, window_bounds = array<i64: 1, 2>}]} {
    %c0 = arith.constant 0 : index
    %c0_0 = arith.constant 0 : index
    %0 = vector.load %arg3[%c0, %c0_0] : memref<64x16xf32, #tpu.memory_space<vmem>>, vector<64x16xf32>
    %c0_1 = arith.constant 0 : index
    %c0_2 = arith.constant 0 : index
    %1 = vector.load %arg1[%c0_1, %c0_2] : memref<2x16xf32, #tpu.memory_space<vmem>>, vector<2x16xf32>
    %2 = tpu.transpose %1, [1, 0] : vector<2x16xf32> -> vector<16x2xf32>
    %cst = arith.constant dense<0.000000e+00> : vector<64x2xf32>
    %3 = tpu.matmul %0, %2, %cst {dimension_numbers = #tpu.dot_dimension_numbers<[1], [0], [0], [1], [0, 0, 1, 1], [], []>} : vector<64x16xf32>, vector<16x2xf32>, vector<64x2xf32> -> vector<64x2xf32>
    %c0_3 = arith.constant 0 : index
    %c0_4 = arith.constant 0 : index
    %4 = vector.load %arg4[%c0_3, %c0_4] : memref<64x1xf32, #tpu.memory_space<vmem>>, vector<64x1xf32>
    %5 = vector.broadcast %4 : vector<64x1xf32> to vector<64x2xf32>
    %6 = arith.addf %3, %5 : vector<64x2xf32>
    %cst_5 = arith.constant 0.000000e+00 : f32
    %7 = vector.broadcast %cst_5 : f32 to vector<64x2xf32>
    %8 = arith.maximumf %6, %7 : vector<64x2xf32>
    %c0_6 = arith.constant 0 : index
    %c0_7 = arith.constant 0 : index
    %9 = vector.load %arg5[%c0_6, %c0_7] : memref<64x8xf32, #tpu.memory_space<vmem>>, vector<64x8xf32>
    %c0_8 = arith.constant 0 : index
    %c0_9 = arith.constant 0 : index
    %10 = vector.load %arg2[%c0_8, %c0_9] : memref<2x8xf32, #tpu.memory_space<vmem>>, vector<2x8xf32>
    %11 = tpu.transpose %10, [1, 0] : vector<2x8xf32> -> vector<8x2xf32>
    %cst_10 = arith.constant dense<0.000000e+00> : vector<64x2xf32>
    %12 = tpu.matmul %9, %11, %cst_10 {dimension_numbers = #tpu.dot_dimension_numbers<[1], [0], [0], [1], [0, 0, 1, 1], [], []>} : vector<64x8xf32>, vector<8x2xf32>, vector<64x2xf32> -> vector<64x2xf32>
    %c0_11 = arith.constant 0 : index
    %c0_12 = arith.constant 0 : index
    %13 = vector.load %arg6[%c0_11, %c0_12] : memref<64x1xf32, #tpu.memory_space<vmem>>, vector<64x1xf32>
    %14 = vector.broadcast %13 : vector<64x1xf32> to vector<64x2xf32>
    %15 = arith.addf %12, %14 : vector<64x2xf32>
    %cst_13 = arith.constant 0.000000e+00 : f32
    %16 = vector.broadcast %cst_13 : f32 to vector<64x2xf32>
    %17 = arith.maximumf %15, %16 : vector<64x2xf32>
    %c0_14 = arith.constant 0 : index
    %c0_15 = arith.constant 0 : index
    %18 = vector.load %arg7[%c0_14, %c0_15] : memref<64x64xf32, #tpu.memory_space<vmem>>, vector<64x64xf32>
    %cst_16 = arith.constant dense<0.000000e+00> : vector<64x2xf32>
    %19 = tpu.matmul %18, %8, %cst_16 {dimension_numbers = #tpu.dot_dimension_numbers<[1], [0], [0], [1], [0, 0, 1, 1], [], []>} : vector<64x64xf32>, vector<64x2xf32>, vector<64x2xf32> -> vector<64x2xf32>
    %c0_17 = arith.constant 0 : index
    %c0_18 = arith.constant 0 : index
    %20 = vector.load %arg8[%c0_17, %c0_18] : memref<64x64xf32, #tpu.memory_space<vmem>>, vector<64x64xf32>
    %cst_19 = arith.constant dense<0.000000e+00> : vector<64x2xf32>
    %21 = tpu.matmul %20, %17, %cst_19 {dimension_numbers = #tpu.dot_dimension_numbers<[1], [0], [0], [1], [0, 0, 1, 1], [], []>} : vector<64x64xf32>, vector<64x2xf32>, vector<64x2xf32> -> vector<64x2xf32>
    %22 = arith.addf %19, %21 : vector<64x2xf32>
    %c0_20 = arith.constant 0 : index
    %c0_21 = arith.constant 0 : index
    %23 = vector.load %arg9[%c0_20, %c0_21] : memref<64x1xf32, #tpu.memory_space<vmem>>, vector<64x1xf32>
    %24 = vector.broadcast %23 : vector<64x1xf32> to vector<64x2xf32>
    %25 = arith.addf %22, %24 : vector<64x2xf32>
    %cst_22 = arith.constant 0.000000e+00 : f32
    %26 = vector.broadcast %cst_22 : f32 to vector<64x2xf32>
    %27 = arith.maximumf %25, %26 : vector<64x2xf32>
    %c0_23 = arith.constant 0 : index
    %c0_24 = arith.constant 0 : index
    %28 = vector.load %arg10[%c0_23, %c0_24] : memref<1x64xf32, #tpu.memory_space<vmem>>, vector<1x64xf32>
    %cst_25 = arith.constant dense<0.000000e+00> : vector<1x2xf32>
    %29 = tpu.matmul %28, %27, %cst_25 {dimension_numbers = #tpu.dot_dimension_numbers<[1], [0], [0], [1], [0, 0, 1, 1], [], []>} : vector<1x64xf32>, vector<64x2xf32>, vector<1x2xf32> -> vector<1x2xf32>
    %c0_26 = arith.constant 0 : index
    %30 = memref.load %arg11[%c0_26] : memref<1xf32, #tpu.memory_space<smem>>
    %31 = vector.broadcast %30 : f32 to vector<1x2xf32>
    %32 = arith.addf %29, %31 : vector<1x2xf32>
    %33 = arith.negf %32 : vector<1x2xf32>
    %34 = math.exp %33 : vector<1x2xf32>
    %cst_27 = arith.constant 1.000000e+00 : f32
    %35 = vector.broadcast %cst_27 : f32 to vector<1x2xf32>
    %36 = arith.addf %35, %34 : vector<1x2xf32>
    %37 = arith.divf %35, %36 : vector<1x2xf32>
    %c0_28 = arith.constant 0 : index
    %c0_29 = arith.constant 0 : index
    %38 = vector.load %arg12[%c0_28, %c0_29] : memref<1x2xf32, #tpu.memory_space<vmem>>, vector<1x2xf32>
    tpu.vector_store %arg12[%c0_28, %c0_29], %37 {strides = array<i32>} : memref<1x2xf32, #tpu.memory_space<vmem>>, vector<1x2xf32>,
    return
  }
  func.func @transform_0(%arg0: i32) -> (i32, i32) {
    %c0_i32 = arith.constant 0 : i32
    %c0_i32_0 = arith.constant 0 : i32
    return %arg0, %c0_i32 : i32, i32
  }
  func.func @transform_1(%arg0: i32) -> (i32, i32) {
    %c0_i32 = arith.constant 0 : i32
    %c0_i32_0 = arith.constant 0 : i32
    return %arg0, %c0_i32 : i32, i32
  }
  func.func @transform_2(%arg0: i32) -> (i32, i32) {
    %c0_i32 = arith.constant 0 : i32
    %c0_i32_0 = arith.constant 0 : i32
    %c0_i32_1 = arith.constant 0 : i32
    return %c0_i32, %c0_i32_0 : i32, i32
  }
  func.func @transform_3(%arg0: i32) -> (i32, i32) {
    %c0_i32 = arith.constant 0 : i32
    %c0_i32_0 = arith.constant 0 : i32
    %c0_i32_1 = arith.constant 0 : i32
    return %c0_i32, %c0_i32_0 : i32, i32
  }
  func.func @transform_4(%arg0: i32) -> (i32, i32) {
    %c0_i32 = arith.constant 0 : i32
    %c0_i32_0 = arith.constant 0 : i32
    %c0_i32_1 = arith.constant 0 : i32
    return %c0_i32, %c0_i32_0 : i32, i32
  }
  func.func @transform_5(%arg0: i32) -> (i32, i32) {
    %c0_i32 = arith.constant 0 : i32
    %c0_i32_0 = arith.constant 0 : i32
    %c0_i32_1 = arith.constant 0 : i32
    return %c0_i32, %c0_i32_0 : i32, i32
  }
  func.func @transform_6(%arg0: i32) -> (i32, i32) {
    %c0_i32 = arith.constant 0 : i32
    %c0_i32_0 = arith.constant 0 : i32
    %c0_i32_1 = arith.constant 0 : i32
    return %c0_i32, %c0_i32_0 : i32, i32
  }
  func.func @transform_7(%arg0: i32) -> (i32, i32) {
    %c0_i32 = arith.constant 0 : i32
    %c0_i32_0 = arith.constant 0 : i32
    %c0_i32_1 = arith.constant 0 : i32
    return %c0_i32, %c0_i32_0 : i32, i32
  }
  func.func @transform_8(%arg0: i32) -> (i32, i32) {
    %c0_i32 = arith.constant 0 : i32
    %c0_i32_0 = arith.constant 0 : i32
    %c0_i32_1 = arith.constant 0 : i32
    return %c0_i32, %c0_i32_0 : i32, i32
  }
  func.func @transform_9(%arg0: i32) -> (i32, i32) {
    %c0_i32 = arith.constant 0 : i32
    %c0_i32_0 = arith.constant 0 : i32
    %c0_i32_1 = arith.constant 0 : i32
    return %c0_i32, %c0_i32_0 : i32, i32
  }
  func.func @transform_10(%arg0: i32) -> i32 {
    %c0_i32 = arith.constant 0 : i32
    %c0_i32_0 = arith.constant 0 : i32
    return %c0_i32 : i32
  }
  func.func @transform_11(%arg0: i32) -> (i32, i32) {
    %c0_i32 = arith.constant 0 : i32
    %c0_i32_0 = arith.constant 0 : i32
    return %c0_i32, %arg0 : i32, i32
  }
}

</mosaic_0001>

<llo_original>
// kernel: tpu_custom_call.1
$region0: #{tpu_custom_call.1}
  #allocation0 [shape = 'u32[]', space=smem, size = 0x4, offset = 0x4, fixed_abs, tag = 'smem constant byte address 0x4 - core index']
  #allocation1 [shape = 'u32[72,128]{1,0:T(1,128)}', space=vmem, size = 0x9000, scoped, tag = 'internal scratch']
  #allocation2 [shape = 'f32[1]{0:T(128)S(6)}', space=smem, size = 0x200, scoped, tag = 'scoped memory for tpu_custom_call.1']
  %s0 = inlined_call_operand.vmem [shape: f32[2,16], index: 0, kind: input, shape index: {}]
  %s1 = inlined_call_operand.vmem [shape: f32[2,8], index: 1, kind: input, shape index: {}]
  %s2 = inlined_call_operand.vmem [shape: f32[64,16], index: 2, kind: input, shape index: {}]
  %s3 = inlined_call_operand.vmem [shape: f32[64,1], index: 3, kind: input, shape index: {}]
  %s4 = inlined_call_operand.vmem [shape: f32[64,8], index: 4, kind: input, shape index: {}]
  %s5 = inlined_call_operand.vmem [shape: f32[64,1], index: 5, kind: input, shape index: {}]
  %s6 = inlined_call_operand.vmem [shape: f32[64,64], index: 6, kind: input, shape index: {}]
  %s7 = inlined_call_operand.vmem [shape: f32[64,64], index: 7, kind: input, shape index: {}]
  %s8 = inlined_call_operand.vmem [shape: f32[64,1], index: 8, kind: input, shape index: {}]
  %s9 = inlined_call_operand.vmem [shape: f32[1,64], index: 9, kind: input, shape index: {}]
  %s10 = inlined_call_operand.<no memory space> [shape: f32[1], index: 10, kind: input, shape index: {}]
  %s11 = inlined_call_operand.hbm [shape: f32[1,2], index: 11, kind: output, shape index: {}]
  %s12 = sld [smem:[#allocation0]]
  $region54: #{tpu_custom_call.1} parent=0
    _
  %s14 = ssub.s32 1, %s12
  %s15 = scalar_select 0, %s14, %s12
  %16 = sst [smem:[#allocation2]] %s10
  $region1: #{tpu_custom_call.1} parent=0
    #allocation3 [shape = 'u8[512]{0}', space=vmem, size = 0x400, scoped, tag = 'output window, operand 0, single buffered']
    #allocation4 [shape = 's32[1]{0}', space=sflag, size = 0x4, scoped, tag = 'scoped memory for tpu_custom_call.1']
    %17 = vsyncpa [#allocation4], 0
    // Predicated region
    $region2: #{tpu_custom_call.1} parent=1 // pred_check
      _
    $region3: #{tpu_custom_call.1} parent=1 // pred_check_branch
      %19 = sbr.rel (0) target = $region5
    $region4: #{tpu_custom_call.1} parent=1 // pred_region
      _
    $region5: #{tpu_custom_call.1} parent=1 // pred_fallthru
      _
    // Predicated region
    $region6: #{tpu_custom_call.1} parent=1 // pred_check
      _
    $region7: #{tpu_custom_call.1} parent=1 // pred_check_branch
      %21 = sbr.rel (0) target = $region9
    $region8: #{tpu_custom_call.1} parent=1 // pred_region
      _
    $region9: #{tpu_custom_call.1} parent=1 // pred_fallthru
      _
    // Predicated region
    $region10: #{tpu_custom_call.1} parent=1 // pred_check
      _
    $region11: #{tpu_custom_call.1} parent=1 // pred_check_branch
      %23 = sbr.rel (0) target = $region13
    $region12: #{tpu_custom_call.1} parent=1 // pred_region
      _
    $region13: #{tpu_custom_call.1} parent=1 // pred_fallthru
      _
    // Predicated region
    $region14: #{tpu_custom_call.1} parent=1 // pred_check
      _
    $region15: #{tpu_custom_call.1} parent=1 // pred_check_branch
      %25 = sbr.rel (0) target = $region17
    $region16: #{tpu_custom_call.1} parent=1 // pred_region
      _
    $region17: #{tpu_custom_call.1} parent=1 // pred_fallthru
      _
    // Predicated region
    $region18: #{tpu_custom_call.1} parent=1 // pred_check
      _
    $region19: #{tpu_custom_call.1} parent=1 // pred_check_branch
      %27 = sbr.rel (0) target = $region21
    $region20: #{tpu_custom_call.1} parent=1 // pred_region
      _
    $region21: #{tpu_custom_call.1} parent=1 // pred_fallthru
      _
    // Predicated region
    $region22: #{tpu_custom_call.1} parent=1 // pred_check
      _
    $region23: #{tpu_custom_call.1} parent=1 // pred_check_branch
      %29 = sbr.rel (0) target = $region25
    $region24: #{tpu_custom_call.1} parent=1 // pred_region
      _
    $region25: #{tpu_custom_call.1} parent=1 // pred_fallthru
      _
    // Predicated region
    $region26: #{tpu_custom_call.1} parent=1 // pred_check
      _
    $region27: #{tpu_custom_call.1} parent=1 // pred_check_branch
      %31 = sbr.rel (0) target = $region29
    $region28: #{tpu_custom_call.1} parent=1 // pred_region
      _
    $region29: #{tpu_custom_call.1} parent=1 // pred_fallthru
      _
    // Predicated region
    $region30: #{tpu_custom_call.1} parent=1 // pred_check
      _
    $region31: #{tpu_custom_call.1} parent=1 // pred_check_branch
      %33 = sbr.rel (0) target = $region33
    $region32: #{tpu_custom_call.1} parent=1 // pred_region
      _
    $region33: #{tpu_custom_call.1} parent=1 // pred_fallthru
      _
    // Predicated region
    $region34: #{tpu_custom_call.1} parent=1 // pred_check
      _
    $region35: #{tpu_custom_call.1} parent=1 // pred_check_branch
      %35 = sbr.rel (0) target = $region37
    $region36: #{tpu_custom_call.1} parent=1 // pred_region
      _
    $region37: #{tpu_custom_call.1} parent=1 // pred_fallthru
      _
    // Predicated region
    $region38: #{tpu_custom_call.1} parent=1 // pred_check
      _
    $region39: #{tpu_custom_call.1} parent=1 // pred_check_branch
      %37 = sbr.rel (0) target = $region41
    $region40: #{tpu_custom_call.1} parent=1 // pred_region
      _
    $region41: #{tpu_custom_call.1} parent=1 // pred_fallthru
      _
    // Predicated region
    $region42: #{tpu_custom_call.1} parent=1 // pred_check
      _
    $region43: #{tpu_custom_call.1} parent=1 // pred_check_branch
      %39 = sbr.rel (0) target = $region45
    $region44: #{tpu_custom_call.1} parent=1 // pred_region
      _
    $region45: #{tpu_custom_call.1} parent=1 // pred_fallthru
      _
    %v40 = vld [vmem:[%s2] sm:$0xff]
    %v41 = vld [vmem:[%s2 + $0x8] sm:$0xff]
    %v42 = vld [vmem:[%s2 + $0x10] sm:$0xff]
    %v43 = vld [vmem:[%s2 + $0x18] sm:$0xff]
    %v44 = vld [vmem:[%s2 + $0x20] sm:$0xff]
    %v45 = vld [vmem:[%s2 + $0x28] sm:$0xff]
    %v46 = vld [vmem:[%s2 + $0x30] sm:$0xff]
    %v47 = vld [vmem:[%s2 + $0x38] sm:$0xff]
    %v48 = vld [vmem:[%s0] sm:$0x3]
    %v49 = vld [vmem:[%s3] sm:$0xff]
    %v50 = vld [vmem:[%s3 + $0x8] sm:$0xff]
    %v51 = vld [vmem:[%s3 + $0x10] sm:$0xff]
    %v52 = vld [vmem:[%s3 + $0x18] sm:$0xff]
    %v53 = vld [vmem:[%s3 + $0x20] sm:$0xff]
    %v54 = vld [vmem:[%s3 + $0x28] sm:$0xff]
    %v55 = vld [vmem:[%s3 + $0x30] sm:$0xff]
    %v56 = vld [vmem:[%s3 + $0x38] sm:$0xff]
    %58 = vset.pattern.permute.xlu0 0
    %59 = vperm.xlu0 %58, %v49
    %v60 = vpop.permute.xlu0 %59
    %63 = vset.pattern.permute.xlu0 0
    %64 = vperm.xlu0 %63, %v50
    %v65 = vpop.permute.xlu0 %64
    %68 = vset.pattern.permute.xlu0 0
    %69 = vperm.xlu0 %68, %v51
    %v70 = vpop.permute.xlu0 %69
    %73 = vset.pattern.permute.xlu0 0
    %74 = vperm.xlu0 %73, %v52
    %v75 = vpop.permute.xlu0 %74
    %78 = vset.pattern.permute.xlu0 0
    %79 = vperm.xlu0 %78, %v53
    %v80 = vpop.permute.xlu0 %79
    %83 = vset.pattern.permute.xlu0 0
    %84 = vperm.xlu0 %83, %v54
    %v85 = vpop.permute.xlu0 %84
    %88 = vset.pattern.permute.xlu0 0
    %89 = vperm.xlu0 %88, %v55
    %v90 = vpop.permute.xlu0 %89
    %93 = vset.pattern.permute.xlu0 0
    %94 = vperm.xlu0 %93, %v56
    %v95 = vpop.permute.xlu0 %94
    %vm97 = vcmask 130048
    %v99 = vsel %vm97, %v40, 0
    %v102 = vsel %vm97, %v41, 0
    %v105 = vsel %vm97, %v42, 0
    %v108 = vsel %vm97, %v43, 0
    %v111 = vsel %vm97, %v44, 0
    %v114 = vsel %vm97, %v45, 0
    %v117 = vsel %vm97, %v46, 0
    %v120 = vsel %vm97, %v47, 0
    %v123 = vsel %vm97, %v48, 0
    %125 = vmatpush.xpose.msra.mxu0 0.0
    %126 = vmatpush.xpose.msra.mxu0 0.0
    %127 = vmatpush.xpose.msra.mxu0 0.0
    %128 = vmatpush.xpose.msra.mxu0 0.0
    %129 = vmatpush.xpose.msra.mxu0 0.0
    %130 = vmatpush.xpose.msra.mxu0 0.0
    %131 = vmatpush.xpose.msra.mxu0 0.0
    %132 = vmatpush.xpose.msra.mxu0 0.0
    %133 = vmatpush.xpose.msra.mxu0 0.0
    %134 = vmatpush.xpose.msra.mxu0 0.0
    %135 = vmatpush.xpose.msra.mxu0 0.0
    %136 = vmatpush.xpose.msra.mxu0 0.0
    %137 = vmatpush.xpose.msra.mxu0 0.0
    %138 = vmatpush.xpose.msra.mxu0 0.0
    %139 = vmatpush.xpose.msra.mxu0 0.0
    %140 = vmatpush.xpose.msra.mxu0 %v123
    %141 = vmatmul.f32.gmra.mxu0 %v99
    %v142 = vpop.f32.mrf.mxu0
    %v143 = vadd.f32 %v60, %v142
    %144 = vmatmul.f32.gmra.mxu0 %v102
    %v145 = vpop.f32.mrf.mxu0
    %v146 = vadd.f32 %v65, %v145
    %147 = vmatmul.f32.gmra.mxu0 %v105
    %v148 = vpop.f32.mrf.mxu0
    %v149 = vadd.f32 %v70, %v148
    %150 = vmatmul.f32.gmra.mxu0 %v108
    %v151 = vpop.f32.mrf.mxu0
    %v152 = vadd.f32 %v75, %v151
    %153 = vmatmul.f32.gmra.mxu0 %v111
    %v154 = vpop.f32.mrf.mxu0
    %v155 = vadd.f32 %v80, %v154
    %156 = vmatmul.f32.gmra.mxu0 %v114
    %v157 = vpop.f32.mrf.mxu0
    %v158 = vadd.f32 %v85, %v157
    %159 = vmatmul.f32.gmra.mxu0 %v117
    %v160 = vpop.f32.mrf.mxu0
    %v161 = vadd.f32 %v90, %v160
    %162 = vmatmul.f32.gmra.mxu0 %v120
    %v163 = vpop.f32.mrf.mxu0
    %v164 = vadd.f32 %v95, %v163
    %165 = vdwg.mxu0
    %v166 = vmax.f32 %v143, 0.0
    %v167 = vmax.f32 %v146, 0.0
    %v168 = vmax.f32 %v149, 0.0
    %v169 = vmax.f32 %v152, 0.0
    %v170 = vmax.f32 %v155, 0.0
    %v171 = vmax.f32 %v158, 0.0
    %v172 = vmax.f32 %v161, 0.0
    %v173 = vmax.f32 %v164, 0.0
    %v174 = vld [vmem:[%s4] sm:$0xff]
    %v175 = vld [vmem:[%s4 + $0x8] sm:$0xff]
    %v176 = vld [vmem:[%s4 + $0x10] sm:$0xff]
    %v177 = vld [vmem:[%s4 + $0x18] sm:$0xff]
    %v178 = vld [vmem:[%s4 + $0x20] sm:$0xff]
    %v179 = vld [vmem:[%s4 + $0x28] sm:$0xff]
    %v180 = vld [vmem:[%s4 + $0x30] sm:$0xff]
    %v181 = vld [vmem:[%s4 + $0x38] sm:$0xff]
    %v182 = vld [vmem:[%s1] sm:$0x3]
    %v183 = vld [vmem:[%s5] sm:$0xff]
    %v184 = vld [vmem:[%s5 + $0x8] sm:$0xff]
    %v185 = vld [vmem:[%s5 + $0x10] sm:$0xff]
    %v186 = vld [vmem:[%s5 + $0x18] sm:$0xff]
    %v187 = vld [vmem:[%s5 + $0x20] sm:$0xff]
    %v188 = vld [vmem:[%s5 + $0x28] sm:$0xff]
    %v189 = vld [vmem:[%s5 + $0x30] sm:$0xff]
    %v190 = vld [vmem:[%s5 + $0x38] sm:$0xff]
    %192 = vset.pattern.permute.xlu0 0
    %193 = vperm.xlu0 %192, %v183
    %v194 = vpop.permute.xlu0 %193
    %197 = vset.pattern.permute.xlu0 0
    %198 = vperm.xlu0 %197, %v184
    %v199 = vpop.permute.xlu0 %198
    %202 = vset.pattern.permute.xlu0 0
    %203 = vperm.xlu0 %202, %v185
    %v204 = vpop.permute.xlu0 %203
    %207 = vset.pattern.permute.xlu0 0
    %208 = vperm.xlu0 %207, %v186
    %v209 = vpop.permute.xlu0 %208
    %212 = vset.pattern.permute.xlu0 0
    %213 = vperm.xlu0 %212, %v187
    %v214 = vpop.permute.xlu0 %213
    %217 = vset.pattern.permute.xlu0 0
    %218 = vperm.xlu0 %217, %v188
    %v219 = vpop.permute.xlu0 %218
    %222 = vset.pattern.permute.xlu0 0
    %223 = vperm.xlu0 %222, %v189
    %v224 = vpop.permute.xlu0 %223
    %227 = vset.pattern.permute.xlu0 0
    %228 = vperm.xlu0 %227, %v190
    %v229 = vpop.permute.xlu0 %228
    %vm231 = vcmask 64512
    %v233 = vsel %vm231, %v174, 0
    %v236 = vsel %vm231, %v175, 0
    %v239 = vsel %vm231, %v176, 0
    %v242 = vsel %vm231, %v177, 0
    %v245 = vsel %vm231, %v178, 0
    %v248 = vsel %vm231, %v179, 0
    %v251 = vsel %vm231, %v180, 0
    %v254 = vsel %vm231, %v181, 0
    %v257 = vsel %vm231, %v182, 0
    %259 = vmatpush.xpose.msra.mxu0 0.0
    %260 = vmatpush.xpose.msra.mxu0 0.0
    %261 = vmatpush.xpose.msra.mxu0 0.0
    %262 = vmatpush.xpose.msra.mxu0 0.0
    %263 = vmatpush.xpose.msra.mxu0 0.0
    %264 = vmatpush.xpose.msra.mxu0 0.0
    %265 = vmatpush.xpose.msra.mxu0 0.0
    %266 = vmatpush.xpose.msra.mxu0 0.0
    %267 = vmatpush.xpose.msra.mxu0 0.0
    %268 = vmatpush.xpose.msra.mxu0 0.0
    %269 = vmatpush.xpose.msra.mxu0 0.0
    %270 = vmatpush.xpose.msra.mxu0 0.0
    %271 = vmatpush.xpose.msra.mxu0 0.0
    %272 = vmatpush.xpose.msra.mxu0 0.0
    %273 = vmatpush.xpose.msra.mxu0 0.0
    %274 = vmatpush.xpose.msra.mxu0 %v257
    %275 = vmatmul.f32.gmra.mxu0 %v233
    %v276 = vpop.f32.mrf.mxu0
    %v277 = vadd.f32 %v194, %v276
    %278 = vmatmul.f32.gmra.mxu0 %v236
    %v279 = vpop.f32.mrf.mxu0
    %v280 = vadd.f32 %v199, %v279
    %281 = vmatmul.f32.gmra.mxu0 %v239
    %v282 = vpop.f32.mrf.mxu0
    %v283 = vadd.f32 %v204, %v282
    %284 = vmatmul.f32.gmra.mxu0 %v242
    %v285 = vpop.f32.mrf.mxu0
    %v286 = vadd.f32 %v209, %v285
    %287 = vmatmul.f32.gmra.mxu0 %v245
    %v288 = vpop.f32.mrf.mxu0
    %v289 = vadd.f32 %v214, %v288
    %290 = vmatmul.f32.gmra.mxu0 %v248
    %v291 = vpop.f32.mrf.mxu0
    %v292 = vadd.f32 %v219, %v291
    %293 = vmatmul.f32.gmra.mxu0 %v251
    %v294 = vpop.f32.mrf.mxu0
    %v295 = vadd.f32 %v224, %v294
    %296 = vmatmul.f32.gmra.mxu0 %v254
    %v297 = vpop.f32.mrf.mxu0
    %v298 = vadd.f32 %v229, %v297
    %299 = vdwg.mxu0
    %v300 = vmax.f32 %v277, 0.0
    %v301 = vmax.f32 %v280, 0.0
    %v302 = vmax.f32 %v283, 0.0
    %v303 = vmax.f32 %v286, 0.0
    %v304 = vmax.f32 %v289, 0.0
    %v305 = vmax.f32 %v292, 0.0
    %v306 = vmax.f32 %v295, 0.0
    %v307 = vmax.f32 %v298, 0.0
    %v308 = vld [vmem:[%s6] sm:$0xff]
    %v309 = vld [vmem:[%s6 + $0x8] sm:$0xff]
    %v310 = vld [vmem:[%s6 + $0x10] sm:$0xff]
    %v311 = vld [vmem:[%s6 + $0x18] sm:$0xff]
    %v312 = vld [vmem:[%s6 + $0x20] sm:$0xff]
    %v313 = vld [vmem:[%s6 + $0x28] sm:$0xff]
    %v314 = vld [vmem:[%s6 + $0x30] sm:$0xff]
    %v315 = vld [vmem:[%s6 + $0x38] sm:$0xff]
    %v316 = vld [vmem:[%s7] sm:$0xff]
    %v317 = vld [vmem:[%s7 + $0x8] sm:$0xff]
    %v318 = vld [vmem:[%s7 + $0x10] sm:$0xff]
    %v319 = vld [vmem:[%s7 + $0x18] sm:$0xff]
    %v320 = vld [vmem:[%s7 + $0x20] sm:$0xff]
    %v321 = vld [vmem:[%s7 + $0x28] sm:$0xff]
    %v322 = vld [vmem:[%s7 + $0x30] sm:$0xff]
    %v323 = vld [vmem:[%s7 + $0x38] sm:$0xff]
    %vm324 = vcmask 523264
    %v326 = vsel %vm324, %v316, 0
    %v329 = vsel %vm324, %v317, 0
    %v332 = vsel %vm324, %v318, 0
    %v335 = vsel %vm324, %v319, 0
    %v338 = vsel %vm324, %v320, 0
    %v341 = vsel %vm324, %v321, 0
    %v344 = vsel %vm324, %v322, 0
    %v347 = vsel %vm324, %v323, 0
    %349 = vmatpush.msra.mxu0 0.0
    %350 = vmatpush.msra.mxu0 0.0
    %351 = vmatpush.msra.mxu0 0.0
    %352 = vmatpush.msra.mxu0 0.0
    %353 = vmatpush.msra.mxu0 0.0
    %354 = vmatpush.msra.mxu0 0.0
    %355 = vmatpush.msra.mxu0 0.0
    %356 = vmatpush.msra.mxu0 0.0
    %357 = vmatpush.msra.mxu0 %v307
    %358 = vmatpush.msra.mxu0 %v306
    %359 = vmatpush.msra.mxu0 %v305
    %360 = vmatpush.msra.mxu0 %v304
    %361 = vmatpush.msra.mxu0 %v303
    %362 = vmatpush.msra.mxu0 %v302
    %363 = vmatpush.msra.mxu0 %v301
    %364 = vmatpush.msra.mxu0 %v300
    %365 = vmatmul.f32.gmra.mxu0 %v326
    %v366 = vpop.f32.mrf.mxu0
    %v367 = vadd.f32 0.0, %v366
    %368 = vmatmul.f32.gmra.mxu0 %v329
    %v369 = vpop.f32.mrf.mxu0
    %v370 = vadd.f32 0.0, %v369
    %371 = vmatmul.f32.gmra.mxu0 %v332
    %v372 = vpop.f32.mrf.mxu0
    %v373 = vadd.f32 0.0, %v372
    %374 = vmatmul.f32.gmra.mxu0 %v335
    %v375 = vpop.f32.mrf.mxu0
    %v376 = vadd.f32 0.0, %v375
    %377 = vmatmul.f32.gmra.mxu0 %v338
    %v378 = vpop.f32.mrf.mxu0
    %v379 = vadd.f32 0.0, %v378
    %380 = vmatmul.f32.gmra.mxu0 %v341
    %v381 = vpop.f32.mrf.mxu0
    %v382 = vadd.f32 0.0, %v381
    %383 = vmatmul.f32.gmra.mxu0 %v344
    %v384 = vpop.f32.mrf.mxu0
    %v385 = vadd.f32 0.0, %v384
    %386 = vmatmul.f32.gmra.mxu0 %v347
    %v387 = vpop.f32.mrf.mxu0
    %v388 = vadd.f32 0.0, %v387
    %389 = vdwg.mxu0
    %v391 = vsel %vm324, %v308, 0
    %v394 = vsel %vm324, %v309, 0
    %v397 = vsel %vm324, %v310, 0
    %v400 = vsel %vm324, %v311, 0
    %v403 = vsel %vm324, %v312, 0
    %v406 = vsel %vm324, %v313, 0
    %v409 = vsel %vm324, %v314, 0
    %v412 = vsel %vm324, %v315, 0
    %414 = vmatpush.msra.mxu0 0.0
    %415 = vmatpush.msra.mxu0 0.0
    %416 = vmatpush.msra.mxu0 0.0
    %417 = vmatpush.msra.mxu0 0.0
    %418 = vmatpush.msra.mxu0 0.0
    %419 = vmatpush.msra.mxu0 0.0
    %420 = vmatpush.msra.mxu0 0.0
    %421 = vmatpush.msra.mxu0 0.0
    %422 = vmatpush.msra.mxu0 %v173
    %423 = vmatpush.msra.mxu0 %v172
    %424 = vmatpush.msra.mxu0 %v171
    %425 = vmatpush.msra.mxu0 %v170
    %426 = vmatpush.msra.mxu0 %v169
    %427 = vmatpush.msra.mxu0 %v168
    %428 = vmatpush.msra.mxu0 %v167
    %429 = vmatpush.msra.mxu0 %v166
    %430 = vmatmul.f32.gmra.mxu0 %v391
    %v431 = vpop.f32.mrf.mxu0
    %v432 = vadd.f32 %v367, %v431
    %433 = vmatmul.f32.gmra.mxu0 %v394
    %v434 = vpop.f32.mrf.mxu0
    %v435 = vadd.f32 %v370, %v434
    %436 = vmatmul.f32.gmra.mxu0 %v397
    %v437 = vpop.f32.mrf.mxu0
    %v438 = vadd.f32 %v373, %v437
    %439 = vmatmul.f32.gmra.mxu0 %v400
    %v440 = vpop.f32.mrf.mxu0
    %v441 = vadd.f32 %v376, %v440
    %442 = vmatmul.f32.gmra.mxu0 %v403
    %v443 = vpop.f32.mrf.mxu0
    %v444 = vadd.f32 %v379, %v443
    %445 = vmatmul.f32.gmra.mxu0 %v406
    %v446 = vpop.f32.mrf.mxu0
    %v447 = vadd.f32 %v382, %v446
    %448 = vmatmul.f32.gmra.mxu0 %v409
    %v449 = vpop.f32.mrf.mxu0
    %v450 = vadd.f32 %v385, %v449
    %451 = vmatmul.f32.gmra.mxu0 %v412
    %v452 = vpop.f32.mrf.mxu0
    %v453 = vadd.f32 %v388, %v452
    %454 = vdwg.mxu0
    %v455 = vld [vmem:[%s8] sm:$0xff]
    %v456 = vld [vmem:[%s8 + $0x8] sm:$0xff]
    %v457 = vld [vmem:[%s8 + $0x10] sm:$0xff]
    %v458 = vld [vmem:[%s8 + $0x18] sm:$0xff]
    %v459 = vld [vmem:[%s8 + $0x20] sm:$0xff]
    %v460 = vld [vmem:[%s8 + $0x28] sm:$0xff]
    %v461 = vld [vmem:[%s8 + $0x30] sm:$0xff]
    %v462 = vld [vmem:[%s8 + $0x38] sm:$0xff]
    %464 = vset.pattern.permute.xlu0 0
    %465 = vperm.xlu0 %464, %v455
    %v466 = vpop.permute.xlu0 %465
    %469 = vset.pattern.permute.xlu0 0
    %470 = vperm.xlu0 %469, %v456
    %v471 = vpop.permute.xlu0 %470
    %474 = vset.pattern.permute.xlu0 0
    %475 = vperm.xlu0 %474, %v457
    %v476 = vpop.permute.xlu0 %475
    %479 = vset.pattern.permute.xlu0 0
    %480 = vperm.xlu0 %479, %v458
    %v481 = vpop.permute.xlu0 %480
    %484 = vset.pattern.permute.xlu0 0
    %485 = vperm.xlu0 %484, %v459
    %v486 = vpop.permute.xlu0 %485
    %489 = vset.pattern.permute.xlu0 0
    %490 = vperm.xlu0 %489, %v460
    %v491 = vpop.permute.xlu0 %490
    %494 = vset.pattern.permute.xlu0 0
    %495 = vperm.xlu0 %494, %v461
    %v496 = vpop.permute.xlu0 %495
    %499 = vset.pattern.permute.xlu0 0
    %500 = vperm.xlu0 %499, %v462
    %v501 = vpop.permute.xlu0 %500
    %v503 = vadd.f32 %v432, %v466
    %v504 = vadd.f32 %v435, %v471
    %v505 = vadd.f32 %v438, %v476
    %v506 = vadd.f32 %v441, %v481
    %v507 = vadd.f32 %v444, %v486
    %v508 = vadd.f32 %v447, %v491
    %v509 = vadd.f32 %v450, %v496
    %v510 = vadd.f32 %v453, %v501
    %v511 = vmax.f32 %v503, 0.0
    %v512 = vmax.f32 %v504, 0.0
    %v513 = vmax.f32 %v505, 0.0
    %v514 = vmax.f32 %v506, 0.0
    %v515 = vmax.f32 %v507, 0.0
    %v516 = vmax.f32 %v508, 0.0
    %v517 = vmax.f32 %v509, 0.0
    %v518 = vmax.f32 %v510, 0.0
    %v519 = vld [vmem:[%s9] sm:$0x1]
    %s520 = sld [smem:[#allocation2]]
    %v521 = vstv %s520
    %v523 = vsel %vm324, %v519, 0
    %525 = vmatpush.msra.mxu0 0.0
    %526 = vmatpush.msra.mxu0 0.0
    %527 = vmatpush.msra.mxu0 0.0
    %528 = vmatpush.msra.mxu0 0.0
    %529 = vmatpush.msra.mxu0 0.0
    %530 = vmatpush.msra.mxu0 0.0
    %531 = vmatpush.msra.mxu0 0.0
    %532 = vmatpush.msra.mxu0 0.0
    %533 = vmatpush.msra.mxu0 %v518
    %534 = vmatpush.msra.mxu0 %v517
    %535 = vmatpush.msra.mxu0 %v516
    %536 = vmatpush.msra.mxu0 %v515
    %537 = vmatpush.msra.mxu0 %v514
    %538 = vmatpush.msra.mxu0 %v513
    %539 = vmatpush.msra.mxu0 %v512
    %540 = vmatpush.msra.mxu0 %v511
    %541 = vmatmul.f32.gmra.mxu0 %v523
    %v542 = vpop.f32.mrf.mxu0
    %v543 = vadd.f32 %v521, %v542
    %544 = vdwg.mxu0
    %v545 = vxor.u32 %v543, 2147483648
    %v546 = vmul.f32 %v545, 1.442695
    %v547 = vpow.pop %v546
    %v548 = vadd.f32 %v547, 1.0
    %v549 = vrcp.pop %v548
    %v550 = vmul.f32 %v548, %v549
    %v551 = vsub.f32 1.0, %v550
    %v552 = vmul.f32 %v549, %v551
    %v553 = vadd.f32 %v549, %v552
    %vm554 = vweird.f32 %v548
    %vm555 = vweird.f32 %v549
    %vm556 = vmor %vm554, %vm555
    %v557 = vsel %vm556, %v549, %v553
    %v558 = vand.u32 2147483647, %v548
    %vm559 = vcmp.eq.f32.partialorder %v558, 8.507059e+37
    %v560 = vand.u32 %v548, 2147483648
    %v561 = vor.u32 1.1754944e-38, %v560
    %v562 = vsel %vm559, %v561, %v557
    %v563 = vmul.f32 1.0, %v562
    %vm564 = vcmask 8192
    %565 = vst.msk [vmem:[#allocation3] sm:$0x1] %vm564, %v563
    // Predicated region
    $region46: #{tpu_custom_call.1} parent=1 // pred_check
      _
    $region47: #{tpu_custom_call.1} parent=1 // pred_check_branch
      %567 = sbr.rel (0) target = $region49
    $region48: #{tpu_custom_call.1} parent=1 // pred_region
      %569 = vsyncadd [#allocation4], 0
      %s571 = sshll.u32 [#allocation3], 4
      %s572 = int_to_ptr.vmem [resolvable:$true] %s571
      %s573 = sshll.u32 %s11, 4
      %s574 = int_to_ptr.hbm [resolvable:$true] %s573
      %576 = dma.vmem_to_hbm [thread:$0]  %s572, 16, %s574, [#allocation4]
    $region49: #{tpu_custom_call.1} parent=1 // pred_fallthru
      _
    // Predicated region
    $region50: #{tpu_custom_call.1} parent=1 // pred_check
      _
    $region51: #{tpu_custom_call.1} parent=1 // pred_check_branch
      %578 = sbr.rel (0) target = $region53
    $region52: #{tpu_custom_call.1} parent=1 // pred_region
      %580 = dma.done [#allocation4], 16
    $region53: #{tpu_custom_call.1} parent=1 // pred_fallthru
      _
    %581 = vsyncpa [#allocation4], 1

</llo_original>
